<compile_context>
chip_gen: v7x
topology: tpu7x:2x2x1
jax: 0.10.0
libtpu: 0.0.40
codegen_flags: <defaults>
</compile_context>

<pallas_src>
import jax
import jax.numpy as jnp
from jax.experimental import pallas as pl
from jax.experimental.pallas import tpu as pltpu


def _round_up(x, m):
    return ((x + m - 1) // m) * m


def _nbytes(shape, dtype):
    n = 1
    for s in shape:
        n *= int(s)
    return n * jnp.dtype(dtype).itemsize


def _vmem_capacity_bytes():
    """Physical VMEM of the current chip; conservative fallback = v7x 64 MiB."""
    try:
        return int(pltpu.get_tpu_info().vmem_capacity_bytes)
    except Exception:
        return 64 << 20


def _default_act_dtype():
    """bf16 transcendentals (~2x EUP rate) on v6e/v7x; f32 on v5e (no bf16 EUP)."""
    try:
        kind = jax.devices()[0].device_kind.lower()
        if "v5e" in kind or "v5 lite" in kind or "v5lite" in kind:
            return jnp.float32
    except Exception:
        pass
    return jnp.bfloat16


def make_decoder_kernel(n_sub, sub_m, act_dtype):
    def kernel(z_ref, w1_ref, b1_ref, w2_ref, b2_ref, w3_ref, b3_ref, out_ref):
        # Weights/biases read once per grid step; biases stay f32 and are added
        # to the f32 MXU accumulator.
        w1 = w1_ref[...]
        w2 = w2_ref[...]
        w3 = w3_ref[...]
        b1 = b1_ref[...]
        b2 = b2_ref[...]
        b3 = b3_ref[...]

        def mlp(zt):
            # fc1 + tanh : bf16 MXU inputs, f32 accumulation.
            h1 = jnp.dot(zt, w1, preferred_element_type=jnp.float32) + b1
            t1 = jnp.tanh(h1.astype(act_dtype)).astype(w2.dtype)
            # fc2 + tanh
            h2 = jnp.dot(t1, w2, preferred_element_type=jnp.float32) + b2
            t2 = jnp.tanh(h2.astype(act_dtype)).astype(w3.dtype)
            # fc3 + sigmoid (exp on EUP, divide via approx reciprocal on EUP).
            logits = jnp.dot(t2, w3, preferred_element_type=jnp.float32) + b3
            return pl.reciprocal(jnp.exp(-logits) + 1.0, approx=True)

        if n_sub == 1:
            out_ref[...] = mlp(z_ref[...]).astype(out_ref.dtype)
        else:
            # Two independent dependency chains -> MXU of one half overlaps the
            # EUP tanh/sigmoid of the other half (static unroll, static offsets).
            for s in range(n_sub):
                rows = pl.ds(s * sub_m, sub_m)
                out_ref[rows, :] = mlp(z_ref[rows, :]).astype(out_ref.dtype)

    return kernel


def prepare_decoder_params(w1, b1, w2, b2, w3, b3, *, compute_dtype=jnp.bfloat16):
    """Pre-cast (bf16) and pre-pad (lane-dense x) the weights ONCE.

    Call this once at init and reuse across `decoder_forward` calls so the
    kernel does not re-read f32 weights from HBM just to down-cast them.
    Weights are [in, out] (transpose of nn.Linear.weight); biases [out] or
    [1, out].
    """
    x_size = int(w3.shape[1])
    x_pad = _round_up(x_size, 128)
    if x_pad != x_size:
        w3 = jnp.pad(w3, ((0, 0), (0, x_pad - x_size)))
        b3 = jnp.pad(jnp.reshape(b3, (1, -1)), ((0, 0), (0, x_pad - x_size)))
    return dict(
        w1=w1.astype(compute_dtype),
        b1=jnp.reshape(b1, (1, -1)).astype(jnp.float32),
        w2=w2.astype(compute_dtype),
        b2=jnp.reshape(b2, (1, -1)).astype(jnp.float32),
        w3=w3.astype(compute_dtype),
        b3=jnp.reshape(b3, (1, -1)).astype(jnp.float32),
        x_size=x_size,
    )


def decoder_forward(params, z, *, tile_m=256, out_dtype=None, act_dtype=None,
                    single_buffer_weights=True):
    """z: [B, z_size] -> p: [B, x_size] using prepared params (see above)."""
    w1, b1 = params["w1"], params["b1"]
    w2, b2 = params["w2"], params["b2"]
    w3, b3 = params["w3"], params["b3"]
    x_size = int(params["x_size"])

    B, z_size = z.shape
    hidden = int(w1.shape[1])
    x_pad = int(w3.shape[1])
    compute_dtype = w1.dtype
    out_dtype = z.dtype if out_dtype is None else out_dtype
    act_dtype = _default_act_dtype() if act_dtype is None else act_dtype

    # Batch tiling: multiples of 16 rows (bf16 sublane packing).
    b16 = _round_up(B, 16)
    tile_m = max(16, min(_round_up(tile_m, 16), b16))
    # v7x has 2 TensorCores: give the "parallel" batch axis >= 2 grid steps
    # whenever the batch allows it (harmless extra step on 1-TC v5e/v6e).
    if b16 >= 32:
        tile_m = min(tile_m, _round_up((b16 + 1) // 2, 16))
    B_pad = _round_up(B, tile_m)

    z_c = z.astype(compute_dtype)
    if B_pad != B:
        z_c = jnp.pad(z_c, ((0, B_pad - B), (0, 0)))

    # Split each batch tile into two independent M-halves (MXU/EUP overlap),
    # but never below 16 bf16 rows per half.
    n_sub = 2 if (tile_m >= 32 and tile_m % 32 == 0) else 1
    sub_m = tile_m // n_sub

    kernel = make_decoder_kernel(n_sub, sub_m, act_dtype)
    grid = (B_pad // tile_m,)

    def run(single_buffer):
        def w_spec(shape):
            # Grid-invariant blocks: single-buffer to halve resident VMEM.
            if single_buffer:
                return pl.BlockSpec(shape, lambda i: (0, 0),
                                    pipeline_mode=pl.Buffered(1))
            return pl.BlockSpec(shape, lambda i: (0, 0))

        wbuf = 1 if single_buffer else 2
        # Actual buffered footprint (no extra 2x over-count).
        block_bytes = (
            2 * _nbytes((tile_m, z_size), compute_dtype)   # z tiles, double-buffered
            + 2 * _nbytes((tile_m, x_pad), out_dtype)      # out tiles, double-buffered
            + wbuf * (_nbytes((z_size, hidden), compute_dtype)
                      + _nbytes((hidden, hidden), compute_dtype)
                      + _nbytes((hidden, x_pad), compute_dtype)
                      + 2 * _nbytes((1, hidden), jnp.float32)
                      + _nbytes((1, x_pad), jnp.float32))
        )
        cap = (3 * _vmem_capacity_bytes()) // 4            # generation-aware cap
        vmem_limit = int(min(max(block_bytes + (4 << 20), 32 << 20), cap))

        out = pl.pallas_call(
            kernel,
            out_shape=jax.ShapeDtypeStruct((B_pad, x_pad), out_dtype),
            grid_spec=pl.GridSpec(
                grid=grid,
                in_specs=[
                    pl.BlockSpec((tile_m, z_size), lambda i: (i, 0)),  # z tile
                    w_spec((z_size, hidden)),                          # W1
                    w_spec((1, hidden)),                               # b1
                    w_spec((hidden, hidden)),                          # W2
                    w_spec((1, hidden)),                               # b2
                    w_spec((hidden, x_pad)),                           # W3 (padded N)
                    w_spec((1, x_pad)),                                # b3 (padded N)
                ],
                out_specs=pl.BlockSpec((tile_m, x_pad), lambda i: (i, 0)),
            ),
            compiler_params=pltpu.CompilerParams(
                dimension_semantics=("parallel",),
                vmem_limit_bytes=vmem_limit,
            ),
        )(z_c, w1, b1, w2, b2, w3, b3)
        return jax.block_until_ready(out)

    if single_buffer_weights:
        try:
            out = run(True)
        except Exception:
            # pipeline_mode hint not supported on this jax/libtpu: same kernel,
            # default double-buffering.
            out = run(False)
    else:
        out = run(False)

    # Strip batch / lane padding.
    return out[:B, :x_size]


def reference_forward(z, w1, b1, w2, b2, w3, b3):
    t = jnp.tanh(z @ w1 + b1)
    t = jnp.tanh(t @ w2 + b2)
    return jax.nn.sigmoid(t @ w3 + b3)


if __name__ == "__main__":
    # Small shapes consistent with Decoder(z_size, hidden_size, x_size)
    batch, z_size, hidden_size, x_size = 16, 16, 32, 64

    key = jax.random.PRNGKey(0)
    kz, k1, k2, k3, kb1, kb2, kb3 = jax.random.split(key, 7)

    z = jax.random.normal(kz, (batch, z_size), dtype=jnp.float32)

    # Deterministic "init": small random weights; stored as [in, out]
    # (the transpose of PyTorch's nn.Linear.weight).
    w1 = jax.random.normal(k1, (z_size, hidden_size), dtype=jnp.float32) * 0.1
    b1 = jax.random.normal(kb1, (1, hidden_size), dtype=jnp.float32) * 0.1
    w2 = jax.random.normal(k2, (hidden_size, hidden_size), dtype=jnp.float32) * 0.1
    b2 = jax.random.normal(kb2, (1, hidden_size), dtype=jnp.float32) * 0.1
    w3 = jax.random.normal(k3, (hidden_size, x_size), dtype=jnp.float32) * 0.1
    b3 = jax.random.normal(kb3, (1, x_size), dtype=jnp.float32) * 0.1

    # One-time parameter prep (bf16 cast + lane padding), reused across calls.
    params = prepare_decoder_params(w1, b1, w2, b2, w3, b3)

    p = decoder_forward(params, z)
    p = jax.block_until_ready(p)

    p_ref = reference_forward(z, w1, b1, w2, b2, w3, b3)
    assert p.shape == (batch, x_size)
    # bf16 MXU inputs / bf16 tanh (f32 accumulation) + approx-recip sigmoid
    # -> loosen tolerance vs. the pure-f32 reference.
    err = float(jnp.max(jnp.abs(p.astype(jnp.float32) - p_ref)))
    assert jnp.allclose(p.astype(jnp.float32), p_ref, atol=2e-2, rtol=2e-2), err

    print("KERNEL_OK")
</pallas_src>

<mosaic_0001>
module attributes {stable_mosaic.version = 11 : i64} {
  func.func @kernel(%arg0: i32, %arg1: memref<16x16xbf16, #tpu.memory_space<vmem>>, %arg2: memref<16x32xbf16, #tpu.memory_space<vmem>>, %arg3: memref<1x32xf32, #tpu.memory_space<vmem>>, %arg4: memref<32x32xbf16, #tpu.memory_space<vmem>>, %arg5: memref<1x32xf32, #tpu.memory_space<vmem>>, %arg6: memref<32x128xbf16, #tpu.memory_space<vmem>>, %arg7: memref<1x128xf32, #tpu.memory_space<vmem>>, %arg8: memref<16x128xf32, #tpu.memory_space<vmem>>) attributes {dimension_semantics = [#tpu.dimension_semantics<parallel>], iteration_bounds = array<i64: 1>, scalar_prefetch = 0 : i64, scratch_operands = 0 : i64, tpu.core_type = #tpu.core_type<tc>, window_params = [{transform_indices = @transform_0, window_bounds = array<i64: 16, 16>}, {pipeline_mode = #tpu.pipeline_mode<synchronous>, transform_indices = @transform_1, window_bounds = array<i64: 16, 32>}, {pipeline_mode = #tpu.pipeline_mode<synchronous>, transform_indices = @transform_2, window_bounds = array<i64: 1, 32>}, {pipeline_mode = #tpu.pipeline_mode<synchronous>, transform_indices = @transform_3, window_bounds = array<i64: 32, 32>}, {pipeline_mode = #tpu.pipeline_mode<synchronous>, transform_indices = @transform_4, window_bounds = array<i64: 1, 32>}, {pipeline_mode = #tpu.pipeline_mode<synchronous>, transform_indices = @transform_5, window_bounds = array<i64: 32, 128>}, {pipeline_mode = #tpu.pipeline_mode<synchronous>, transform_indices = @transform_6, window_bounds = array<i64: 1, 128>}, {transform_indices = @transform_7, window_bounds = array<i64: 16, 128>}]} {
    %c0 = arith.constant 0 : index
    %c0_0 = arith.constant 0 : index
    %0 = vector.load %arg2[%c0, %c0_0] : memref<16x32xbf16, #tpu.memory_space<vmem>>, vector<16x32xbf16>
    %c0_1 = arith.constant 0 : index
    %c0_2 = arith.constant 0 : index
    %1 = vector.load %arg4[%c0_1, %c0_2] : memref<32x32xbf16, #tpu.memory_space<vmem>>, vector<32x32xbf16>
    %c0_3 = arith.constant 0 : index
    %c0_4 = arith.constant 0 : index
    %2 = vector.load %arg6[%c0_3, %c0_4] : memref<32x128xbf16, #tpu.memory_space<vmem>>, vector<32x128xbf16>
    %c0_5 = arith.constant 0 : index
    %c0_6 = arith.constant 0 : index
    %3 = vector.load %arg3[%c0_5, %c0_6] : memref<1x32xf32, #tpu.memory_space<vmem>>, vector<1x32xf32>
    %c0_7 = arith.constant 0 : index
    %c0_8 = arith.constant 0 : index
    %4 = vector.load %arg5[%c0_7, %c0_8] : memref<1x32xf32, #tpu.memory_space<vmem>>, vector<1x32xf32>
    %c0_9 = arith.constant 0 : index
    %c0_10 = arith.constant 0 : index
    %5 = vector.load %arg7[%c0_9, %c0_10] : memref<1x128xf32, #tpu.memory_space<vmem>>, vector<1x128xf32>
    %c0_11 = arith.constant 0 : index
    %c0_12 = arith.constant 0 : index
    %6 = vector.load %arg1[%c0_11, %c0_12] : memref<16x16xbf16, #tpu.memory_space<vmem>>, vector<16x16xbf16>
    %cst = arith.constant dense<0.000000e+00> : vector<16x32xf32>
    %7 = tpu.matmul %6, %0, %cst {dimension_numbers = #tpu.dot_dimension_numbers<[1], [0], [0], [1], [0, 0, 1, 1], [], []>} : vector<16x16xbf16>, vector<16x32xbf16>, vector<16x32xf32> -> vector<16x32xf32>
    %8 = vector.broadcast %3 : vector<1x32xf32> to vector<16x32xf32>
    %9 = arith.addf %7, %8 : vector<16x32xf32>
    %10 = arith.truncf %9 : vector<16x32xf32> to vector<16x32xbf16>
    %11 = math.tanh %10 : vector<16x32xbf16>
    %cst_13 = arith.constant dense<0.000000e+00> : vector<16x32xf32>
    %12 = tpu.matmul %11, %1, %cst_13 {dimension_numbers = #tpu.dot_dimension_numbers<[1], [0], [0], [1], [0, 0, 1, 1], [], []>} : vector<16x32xbf16>, vector<32x32xbf16>, vector<16x32xf32> -> vector<16x32xf32>
    %13 = vector.broadcast %4 : vector<1x32xf32> to vector<16x32xf32>
    %14 = arith.addf %12, %13 : vector<16x32xf32>
    %15 = arith.truncf %14 : vector<16x32xf32> to vector<16x32xbf16>
    %16 = math.tanh %15 : vector<16x32xbf16>
    %cst_14 = arith.constant dense<0.000000e+00> : vector<16x128xf32>
    %17 = tpu.matmul %16, %2, %cst_14 {dimension_numbers = #tpu.dot_dimension_numbers<[1], [0], [0], [1], [0, 0, 1, 1], [], []>} : vector<16x32xbf16>, vector<32x128xbf16>, vector<16x128xf32> -> vector<16x128xf32>
    %18 = vector.broadcast %5 : vector<1x128xf32> to vector<16x128xf32>
    %19 = arith.addf %17, %18 : vector<16x128xf32>
    %cst_15 = arith.constant 0.000000e+00 : f32
    %20 = vector.broadcast %cst_15 : f32 to vector<16x128xf32>
    %21 = arith.subf %20, %19 : vector<16x128xf32>
    %22 = math.exp %21 : vector<16x128xf32>
    %cst_16 = arith.constant 1.000000e+00 : f32
    %23 = vector.broadcast %cst_16 : f32 to vector<16x128xf32>
    %24 = arith.addf %22, %23 : vector<16x128xf32>
    %25 = tpu.reciprocal %24 {approx = true} : vector<16x128xf32> -> vector<16x128xf32>
    %c0_17 = arith.constant 0 : index
    %c0_18 = arith.constant 0 : index
    %26 = vector.load %arg8[%c0_17, %c0_18] : memref<16x128xf32, #tpu.memory_space<vmem>>, vector<16x128xf32>
    tpu.vector_store %arg8[%c0_17, %c0_18], %25 {strides = array<i32>} : memref<16x128xf32, #tpu.memory_space<vmem>>, vector<16x128xf32>,
    return
  }
  func.func @transform_0(%arg0: i32) -> (i32, i32) {
    %c0_i32 = arith.constant 0 : i32
    %c0_i32_0 = arith.constant 0 : i32
    return %arg0, %c0_i32 : i32, i32
  }
  func.func @transform_1(%arg0: i32) -> (i32, i32) {
    %c0_i32 = arith.constant 0 : i32
    %c0_i32_0 = arith.constant 0 : i32
    %c0_i32_1 = arith.constant 0 : i32
    return %c0_i32, %c0_i32_0 : i32, i32
  }
  func.func @transform_2(%arg0: i32) -> (i32, i32) {
    %c0_i32 = arith.constant 0 : i32
    %c0_i32_0 = arith.constant 0 : i32
    %c0_i32_1 = arith.constant 0 : i32
    return %c0_i32, %c0_i32_0 : i32, i32
  }
  func.func @transform_3(%arg0: i32) -> (i32, i32) {
    %c0_i32 = arith.constant 0 : i32
    %c0_i32_0 = arith.constant 0 : i32
    %c0_i32_1 = arith.constant 0 : i32
    return %c0_i32, %c0_i32_0 : i32, i32
  }
  func.func @transform_4(%arg0: i32) -> (i32, i32) {
    %c0_i32 = arith.constant 0 : i32
    %c0_i32_0 = arith.constant 0 : i32
    %c0_i32_1 = arith.constant 0 : i32
    return %c0_i32, %c0_i32_0 : i32, i32
  }
  func.func @transform_5(%arg0: i32) -> (i32, i32) {
    %c0_i32 = arith.constant 0 : i32
    %c0_i32_0 = arith.constant 0 : i32
    %c0_i32_1 = arith.constant 0 : i32
    return %c0_i32, %c0_i32_0 : i32, i32
  }
  func.func @transform_6(%arg0: i32) -> (i32, i32) {
    %c0_i32 = arith.constant 0 : i32
    %c0_i32_0 = arith.constant 0 : i32
    %c0_i32_1 = arith.constant 0 : i32
    return %c0_i32, %c0_i32_0 : i32, i32
  }
  func.func @transform_7(%arg0: i32) -> (i32, i32) {
    %c0_i32 = arith.constant 0 : i32
    %c0_i32_0 = arith.constant 0 : i32
    return %arg0, %c0_i32 : i32, i32
  }
}

module attributes {stable_mosaic.version = 11 : i64} {
  func.func @kernel(%arg0: i32, %arg1: memref<16x16xbf16, #tpu.memory_space<vmem>>, %arg2: memref<16x32xbf16, #tpu.memory_space<vmem>>, %arg3: memref<1x32xf32, #tpu.memory_space<vmem>>, %arg4: memref<32x32xbf16, #tpu.memory_space<vmem>>, %arg5: memref<1x32xf32, #tpu.memory_space<vmem>>, %arg6: memref<32x128xbf16, #tpu.memory_space<vmem>>, %arg7: memref<1x128xf32, #tpu.memory_space<vmem>>, %arg8: memref<16x128xf32, #tpu.memory_space<vmem>>) attributes {dimension_semantics = [#tpu.dimension_semantics<parallel>], iteration_bounds = array<i64: 1>, scalar_prefetch = 0 : i64, scratch_operands = 0 : i64, tpu.core_type = #tpu.core_type<tc>, window_params = [{transform_indices = @transform_0, window_bounds = array<i64: 16, 16>}, {pipeline_mode = #tpu.pipeline_mode<synchronous>, transform_indices = @transform_1, window_bounds = array<i64: 16, 32>}, {pipeline_mode = #tpu.pipeline_mode<synchronous>, transform_indices = @transform_2, window_bounds = array<i64: 1, 32>}, {pipeline_mode = #tpu.pipeline_mode<synchronous>, transform_indices = @transform_3, window_bounds = array<i64: 32, 32>}, {pipeline_mode = #tpu.pipeline_mode<synchronous>, transform_indices = @transform_4, window_bounds = array<i64: 1, 32>}, {pipeline_mode = #tpu.pipeline_mode<synchronous>, transform_indices = @transform_5, window_bounds = array<i64: 32, 128>}, {pipeline_mode = #tpu.pipeline_mode<synchronous>, transform_indices = @transform_6, window_bounds = array<i64: 1, 128>}, {transform_indices = @transform_7, window_bounds = array<i64: 16, 128>}]} {
    %c0 = arith.constant 0 : index
    %c0_0 = arith.constant 0 : index
    %0 = vector.load %arg2[%c0, %c0_0] : memref<16x32xbf16, #tpu.memory_space<vmem>>, vector<16x32xbf16>
    %c0_1 = arith.constant 0 : index
    %c0_2 = arith.constant 0 : index
    %1 = vector.load %arg4[%c0_1, %c0_2] : memref<32x32xbf16, #tpu.memory_space<vmem>>, vector<32x32xbf16>
    %c0_3 = arith.constant 0 : index
    %c0_4 = arith.constant 0 : index
    %2 = vector.load %arg6[%c0_3, %c0_4] : memref<32x128xbf16, #tpu.memory_space<vmem>>, vector<32x128xbf16>
    %c0_5 = arith.constant 0 : index
    %c0_6 = arith.constant 0 : index
    %3 = vector.load %arg3[%c0_5, %c0_6] : memref<1x32xf32, #tpu.memory_space<vmem>>, vector<1x32xf32>
    %c0_7 = arith.constant 0 : index
    %c0_8 = arith.constant 0 : index
    %4 = vector.load %arg5[%c0_7, %c0_8] : memref<1x32xf32, #tpu.memory_space<vmem>>, vector<1x32xf32>
    %c0_9 = arith.constant 0 : index
    %c0_10 = arith.constant 0 : index
    %5 = vector.load %arg7[%c0_9, %c0_10] : memref<1x128xf32, #tpu.memory_space<vmem>>, vector<1x128xf32>
    %c0_11 = arith.constant 0 : index
    %c0_12 = arith.constant 0 : index
    %6 = vector.load %arg1[%c0_11, %c0_12] : memref<16x16xbf16, #tpu.memory_space<vmem>>, vector<16x16xbf16>
    %cst = arith.constant dense<0.000000e+00> : vector<16x32xf32>
    %7 = tpu.matmul %6, %0, %cst {dimension_numbers = #tpu.dot_dimension_numbers<[1], [0], [0], [1], [0, 0, 1, 1], [], []>} : vector<16x16xbf16>, vector<16x32xbf16>, vector<16x32xf32> -> vector<16x32xf32>
    %8 = vector.broadcast %3 : vector<1x32xf32> to vector<16x32xf32>
    %9 = arith.addf %7, %8 : vector<16x32xf32>
    %10 = arith.truncf %9 : vector<16x32xf32> to vector<16x32xbf16>
    %11 = math.tanh %10 : vector<16x32xbf16>
    %cst_13 = arith.constant dense<0.000000e+00> : vector<16x32xf32>
    %12 = tpu.matmul %11, %1, %cst_13 {dimension_numbers = #tpu.dot_dimension_numbers<[1], [0], [0], [1], [0, 0, 1, 1], [], []>} : vector<16x32xbf16>, vector<32x32xbf16>, vector<16x32xf32> -> vector<16x32xf32>
    %13 = vector.broadcast %4 : vector<1x32xf32> to vector<16x32xf32>
    %14 = arith.addf %12, %13 : vector<16x32xf32>
    %15 = arith.truncf %14 : vector<16x32xf32> to vector<16x32xbf16>
    %16 = math.tanh %15 : vector<16x32xbf16>
    %cst_14 = arith.constant dense<0.000000e+00> : vector<16x128xf32>
    %17 = tpu.matmul %16, %2, %cst_14 {dimension_numbers = #tpu.dot_dimension_numbers<[1], [0], [0], [1], [0, 0, 1, 1], [], []>} : vector<16x32xbf16>, vector<32x128xbf16>, vector<16x128xf32> -> vector<16x128xf32>
    %18 = vector.broadcast %5 : vector<1x128xf32> to vector<16x128xf32>
    %19 = arith.addf %17, %18 : vector<16x128xf32>
    %cst_15 = arith.constant 0.000000e+00 : f32
    %20 = vector.broadcast %cst_15 : f32 to vector<16x128xf32>
    %21 = arith.subf %20, %19 : vector<16x128xf32>
    %22 = math.exp %21 : vector<16x128xf32>
    %cst_16 = arith.constant 1.000000e+00 : f32
    %23 = vector.broadcast %cst_16 : f32 to vector<16x128xf32>
    %24 = arith.addf %22, %23 : vector<16x128xf32>
    %25 = tpu.reciprocal %24 {approx = true} : vector<16x128xf32> -> vector<16x128xf32>
    %c0_17 = arith.constant 0 : index
    %c0_18 = arith.constant 0 : index
    %26 = vector.load %arg8[%c0_17, %c0_18] : memref<16x128xf32, #tpu.memory_space<vmem>>, vector<16x128xf32>
    tpu.vector_store %arg8[%c0_17, %c0_18], %25 {strides = array<i32>} : memref<16x128xf32, #tpu.memory_space<vmem>>, vector<16x128xf32>,
    return
  }
  func.func @transform_0(%arg0: i32) -> (i32, i32) {
    %c0_i32 = arith.constant 0 : i32
    %c0_i32_0 = arith.constant 0 : i32
    return %arg0, %c0_i32 : i32, i32
  }
  func.func @transform_1(%arg0: i32) -> (i32, i32) {
    %c0_i32 = arith.constant 0 : i32
    %c0_i32_0 = arith.constant 0 : i32
    %c0_i32_1 = arith.constant 0 : i32
    return %c0_i32, %c0_i32_0 : i32, i32
  }
  func.func @transform_2(%arg0: i32) -> (i32, i32) {
    %c0_i32 = arith.constant 0 : i32
    %c0_i32_0 = arith.constant 0 : i32
    %c0_i32_1 = arith.constant 0 : i32
    return %c0_i32, %c0_i32_0 : i32, i32
  }
  func.func @transform_3(%arg0: i32) -> (i32, i32) {
    %c0_i32 = arith.constant 0 : i32
    %c0_i32_0 = arith.constant 0 : i32
    %c0_i32_1 = arith.constant 0 : i32
    return %c0_i32, %c0_i32_0 : i32, i32
  }
  func.func @transform_4(%arg0: i32) -> (i32, i32) {
    %c0_i32 = arith.constant 0 : i32
    %c0_i32_0 = arith.constant 0 : i32
    %c0_i32_1 = arith.constant 0 : i32
    return %c0_i32, %c0_i32_0 : i32, i32
  }
  func.func @transform_5(%arg0: i32) -> (i32, i32) {
    %c0_i32 = arith.constant 0 : i32
    %c0_i32_0 = arith.constant 0 : i32
    %c0_i32_1 = arith.constant 0 : i32
    return %c0_i32, %c0_i32_0 : i32, i32
  }
  func.func @transform_6(%arg0: i32) -> (i32, i32) {
    %c0_i32 = arith.constant 0 : i32
    %c0_i32_0 = arith.constant 0 : i32
    %c0_i32_1 = arith.constant 0 : i32
    return %c0_i32, %c0_i32_0 : i32, i32
  }
  func.func @transform_7(%arg0: i32) -> (i32, i32) {
    %c0_i32 = arith.constant 0 : i32
    %c0_i32_0 = arith.constant 0 : i32
    return %arg0, %c0_i32 : i32, i32
  }
}

</mosaic_0001>

<llo_original>
// kernel: tpu_custom_call.1
$region0: #{tpu_custom_call.1}
  #allocation0 [shape = 'u32[]', space=smem, size = 0x4, offset = 0x4, fixed_abs, tag = 'smem constant byte address 0x4 - core index']
  #allocation1 [shape = 'u32[144,128]{1,0:T(1,128)}', space=vmem, size = 0x12000, scoped, tag = 'internal scratch']
  %s0 = inlined_call_operand.hbm [shape: bf16[16,16], index: 0, kind: input, shape index: {}]
  %s1 = inlined_call_operand.hbm [shape: bf16[16,32], index: 1, kind: input, shape index: {}]
  %s2 = inlined_call_operand.vmem [shape: f32[1,32], index: 2, kind: input, shape index: {}]
  %s3 = inlined_call_operand.hbm [shape: bf16[32,32], index: 3, kind: input, shape index: {}]
  %s4 = inlined_call_operand.vmem [shape: f32[1,32], index: 4, kind: input, shape index: {}]
  %s5 = inlined_call_operand.vmem [shape: bf16[32,128], index: 5, kind: input, shape index: {}]
  %s6 = inlined_call_operand.vmem [shape: f32[1,128], index: 6, kind: input, shape index: {}]
  %s7 = inlined_call_operand.hbm [shape: f32[16,128], index: 7, kind: output, shape index: {}]
  %s8 = sld [smem:[#allocation0]]
  $region50: #{tpu_custom_call.1} parent=0
    _
  %s10 = ssub.s32 1, %s8
  %s11 = scalar_select 0, %s10, %s8
  $region1: #{tpu_custom_call.1} parent=0
    #allocation2 [shape = 'u8[4096]{0}', space=vmem, size = 0x1000, scoped, tag = 'input window, operand 0, single buffered']
    #allocation3 [shape = 's32[1]{0}', space=sflag, size = 0x4, scoped, tag = 'scoped memory for tpu_custom_call.1']
    #allocation4 [shape = 's32[1]{0}', space=sflag, size = 0x4, scoped, tag = 'scoped memory for tpu_custom_call.1']
    #allocation5 [shape = 'u8[4096]{0}', space=vmem, size = 0x1000, scoped, tag = 'input window, operand 1, single buffered']
    #allocation6 [shape = 's32[1]{0}', space=sflag, size = 0x4, scoped, tag = 'scoped memory for tpu_custom_call.1']
    #allocation7 [shape = 'u8[8192]{0}', space=vmem, size = 0x2000, scoped, tag = 'input window, operand 3, single buffered']
    #allocation8 [shape = 'u8[8192]{0}', space=vmem, size = 0x2000, scoped, tag = 'output window, operand 0, single buffered']
    %12 = vsyncpa [#allocation3], 0
    %13 = vsyncpa [#allocation6], 0
    %14 = vsyncpa [#allocation4], 0
    // Predicated region
    $region2: #{tpu_custom_call.1} parent=1 // pred_check
      _
    $region3: #{tpu_custom_call.1} parent=1 // pred_check_branch
      %16 = sbr.rel (0) target = $region5
    $region4: #{tpu_custom_call.1} parent=1 // pred_region
      %s18 = ssub.s32 128, 128
      %19 = vsyncadd [#allocation3], %s18
      %s20 = sshll.u32 [#allocation2], 4
      %s21 = int_to_ptr.vmem [resolvable:$true] %s20
      %26 = dma.hbm_to_vmem [thread:$0]  %s0, 128, %s21, [#allocation3], 64, 64, 4
    $region5: #{tpu_custom_call.1} parent=1 // pred_fallthru
      _
    // Predicated region
    $region6: #{tpu_custom_call.1} parent=1 // pred_check
      _
    $region7: #{tpu_custom_call.1} parent=1 // pred_check_branch
      %28 = sbr.rel (0) target = $region9
    $region8: #{tpu_custom_call.1} parent=1 // pred_region
      %s30 = ssub.s32 128, 128
      %31 = vsyncadd [#allocation6], %s30
      %s32 = sshll.u32 [#allocation5], 4
      %s33 = int_to_ptr.vmem [resolvable:$true] %s32
      %38 = dma.hbm_to_vmem [thread:$0]  %s1, 128, %s33, [#allocation6], 64, 64, 4
    $region9: #{tpu_custom_call.1} parent=1 // pred_fallthru
      _
    // Predicated region
    $region10: #{tpu_custom_call.1} parent=1 // pred_check
      _
    $region11: #{tpu_custom_call.1} parent=1 // pred_check_branch
      %40 = sbr.rel (0) target = $region13
    $region12: #{tpu_custom_call.1} parent=1 // pred_region
      _
    $region13: #{tpu_custom_call.1} parent=1 // pred_fallthru
      _
    // Predicated region
    $region14: #{tpu_custom_call.1} parent=1 // pred_check
      _
    $region15: #{tpu_custom_call.1} parent=1 // pred_check_branch
      %42 = sbr.rel (0) target = $region17
    $region16: #{tpu_custom_call.1} parent=1 // pred_region
      %s44 = ssub.s32 256, 256
      %45 = vsyncadd [#allocation6], %s44
      %s46 = sshll.u32 [#allocation7], 4
      %s47 = int_to_ptr.vmem [resolvable:$true] %s46
      %52 = dma.hbm_to_vmem [thread:$0]  %s3, 256, %s47, [#allocation6], 64, 64, 4
    $region17: #{tpu_custom_call.1} parent=1 // pred_fallthru
      _
    // Predicated region
    $region18: #{tpu_custom_call.1} parent=1 // pred_check
      _
    $region19: #{tpu_custom_call.1} parent=1 // pred_check_branch
      %54 = sbr.rel (0) target = $region21
    $region20: #{tpu_custom_call.1} parent=1 // pred_region
      _
    $region21: #{tpu_custom_call.1} parent=1 // pred_fallthru
      _
    // Predicated region
    $region22: #{tpu_custom_call.1} parent=1 // pred_check
      _
    $region23: #{tpu_custom_call.1} parent=1 // pred_check_branch
      %56 = sbr.rel (0) target = $region25
    $region24: #{tpu_custom_call.1} parent=1 // pred_region
      _
    $region25: #{tpu_custom_call.1} parent=1 // pred_fallthru
      _
    // Predicated region
    $region26: #{tpu_custom_call.1} parent=1 // pred_check
      _
    $region27: #{tpu_custom_call.1} parent=1 // pred_check_branch
      %58 = sbr.rel (0) target = $region29
    $region28: #{tpu_custom_call.1} parent=1 // pred_region
      _
    $region29: #{tpu_custom_call.1} parent=1 // pred_fallthru
      _
    // Predicated region
    $region30: #{tpu_custom_call.1} parent=1 // pred_check
      _
    $region31: #{tpu_custom_call.1} parent=1 // pred_check_branch
      %60 = sbr.rel (0) target = $region33
    $region32: #{tpu_custom_call.1} parent=1 // pred_region
      %61 = dma.done [#allocation3], 128
    $region33: #{tpu_custom_call.1} parent=1 // pred_fallthru
      _
    // Predicated region
    $region34: #{tpu_custom_call.1} parent=1 // pred_check
      _
    $region35: #{tpu_custom_call.1} parent=1 // pred_check_branch
      %63 = sbr.rel (0) target = $region37
    $region36: #{tpu_custom_call.1} parent=1 // pred_region
      %64 = dma.done [#allocation6], 128
    $region37: #{tpu_custom_call.1} parent=1 // pred_fallthru
      _
    // Predicated region
    $region38: #{tpu_custom_call.1} parent=1 // pred_check
      _
    $region39: #{tpu_custom_call.1} parent=1 // pred_check_branch
      %66 = sbr.rel (0) target = $region41
    $region40: #{tpu_custom_call.1} parent=1 // pred_region
      %67 = dma.done [#allocation6], 256
    $region41: #{tpu_custom_call.1} parent=1 // pred_fallthru
      _
    %v69 = vld [vmem:[#allocation5] sm:$0xf]
    %v70 = vld [vmem:[#allocation5 + $0x4] sm:$0xf]
    %v71 = vld [vmem:[#allocation7] sm:$0xf]
    %v72 = vld [vmem:[#allocation7 + $0x4] sm:$0xf]
    %v73 = vld [vmem:[#allocation7 + $0x8] sm:$0xf]
    %v74 = vld [vmem:[#allocation7 + $0xc] sm:$0xf]
    %v75 = vld [vmem:[%s5] sm:$0xf]
    %v76 = vld [vmem:[%s5 + $0x4] sm:$0xf]
    %v77 = vld [vmem:[%s5 + $0x8] sm:$0xf]
    %v78 = vld [vmem:[%s5 + $0xc] sm:$0xf]
    %v79 = vld [vmem:[%s2] sm:$0x1]
    %v80 = vld [vmem:[%s4] sm:$0x1]
    %v81 = vld [vmem:[%s6] sm:$0x1]
    %v82 = vld [vmem:[#allocation2] sm:$0xf]
    %v83 = vld [vmem:[#allocation2 + $0x4] sm:$0xf]
    %v85 = vlaneseq
    %v86 = vshrl.u32 %v85, 7
    %v87 = vsub.s32 0, %v86
    %v88 = vrot.slane %v79, %v87
    %v92 = vunpack.c.l.b16 %v82
    %v93 = vunpack.c.l.b16 %v83
    %v94 = vpack.c.b16 %v93, %v92
    %v97 = vunpack.c.l.b16 %v69
    %v98 = vunpack.c.l.b16 %v70
    %v99 = vpack.c.b16 %v98, %v97
    %vm101 = vcmask 130048
    %v103 = vsel %vm101, %v94, 0
    %105 = vmatprep.subr.bf16.mxu0 0
    %106 = vmatpush1.bf16.msra.mxu0 %v99
    %107 = vmatprep.subr.bf16.mxu0 0
    %108 = vmatpush1.bf16.msra.mxu0 0
    %109 = vmatprep.subr.bf16.mxu0 0
    %110 = vmatpush1.bf16.msra.mxu0 0
    %111 = vmatprep.subr.bf16.mxu0 0
    %112 = vmatpush1.bf16.msra.mxu0 0
    %113 = vmatprep.subr.bf16.mxu0 0
    %114 = vmatpush1.bf16.msra.mxu0 0
    %115 = vmatprep.subr.bf16.mxu0 0
    %116 = vmatpush1.bf16.msra.mxu0 0
    %117 = vmatprep.subr.bf16.mxu0 0
    %118 = vmatpush1.bf16.msra.mxu0 0
    %119 = vmatprep.subr.bf16.mxu0 0
    %120 = vmatpush1.bf16.msra.mxu0 0
    %121 = vmatprep.subr.bf16.mxu0 0
    %122 = vmatpush1.bf16.msra.mxu0 0
    %123 = vmatprep.subr.bf16.mxu0 0
    %124 = vmatpush1.bf16.msra.mxu0 0
    %125 = vmatprep.subr.bf16.mxu0 0
    %126 = vmatpush1.bf16.msra.mxu0 0
    %127 = vmatprep.subr.bf16.mxu0 0
    %128 = vmatpush1.bf16.msra.mxu0 0
    %129 = vmatprep.subr.bf16.mxu0 0
    %130 = vmatpush1.bf16.msra.mxu0 0
    %131 = vmatprep.subr.bf16.mxu0 0
    %132 = vmatpush1.bf16.msra.mxu0 0
    %133 = vmatprep.subr.bf16.mxu0 0
    %134 = vmatpush1.bf16.msra.mxu0 0
    %135 = vmatprep.subr.bf16.mxu0 0
    %136 = vmatpush1.bf16.msra.mxu0 0
    %137 = vmatprep.mubr.bf16.mxu0 0
    %138 = vmatmul.mubr.bf16.gmra.mrb[0].mxu0 %v103
    %v139 = vpop.f32.mrb[0].mxu0
    %v140 = vadd.f32 %v88, %v139
    %v141 = vpop.f32.mrb[0].mxu0
    %v142 = vpop.f32.mrb[0].mxu0
    %v143 = vadd.f32 %v88, %v142
    %v144 = vpop.f32.mrb[0].mxu0
    %145 = vdwg.mxu0
    %v146 = vpack.c.bf16 %v143, %v140
    %v147 = vtanh.bf16.pop %v146
    %v149 = vlaneseq
    %v150 = vshrl.u32 %v149, 7
    %v151 = vsub.s32 0, %v150
    %v152 = vrot.slane %v80, %v151
    %v158 = vunpack.c.l.b16 %v71
    %v159 = vunpack.c.l.b16 %v72
    %v160 = vunpack.c.l.b16 %v73
    %v161 = vunpack.c.l.b16 %v74
    %v162 = vpack.c.b16 %v159, %v158
    %v163 = vpack.c.b16 %v161, %v160
    %vm166 = vcmask 261120
    %v168 = vsel %vm166, %v147, 0
    %170 = vmatprep.subr.bf16.mxu0 0
    %171 = vmatpush1.bf16.msra.mxu0 %v162
    %172 = vmatprep.subr.bf16.mxu0 0
    %173 = vmatpush1.bf16.msra.mxu0 %v163
    %174 = vmatprep.subr.bf16.mxu0 0
    %175 = vmatpush1.bf16.msra.mxu0 0
    %176 = vmatprep.subr.bf16.mxu0 0
    %177 = vmatpush1.bf16.msra.mxu0 0
    %178 = vmatprep.subr.bf16.mxu0 0
    %179 = vmatpush1.bf16.msra.mxu0 0
    %180 = vmatprep.subr.bf16.mxu0 0
    %181 = vmatpush1.bf16.msra.mxu0 0
    %182 = vmatprep.subr.bf16.mxu0 0
    %183 = vmatpush1.bf16.msra.mxu0 0
    %184 = vmatprep.subr.bf16.mxu0 0
    %185 = vmatpush1.bf16.msra.mxu0 0
    %186 = vmatprep.subr.bf16.mxu0 0
    %187 = vmatpush1.bf16.msra.mxu0 0
    %188 = vmatprep.subr.bf16.mxu0 0
    %189 = vmatpush1.bf16.msra.mxu0 0
    %190 = vmatprep.subr.bf16.mxu0 0
    %191 = vmatpush1.bf16.msra.mxu0 0
    %192 = vmatprep.subr.bf16.mxu0 0
    %193 = vmatpush1.bf16.msra.mxu0 0
    %194 = vmatprep.subr.bf16.mxu0 0
    %195 = vmatpush1.bf16.msra.mxu0 0
    %196 = vmatprep.subr.bf16.mxu0 0
    %197 = vmatpush1.bf16.msra.mxu0 0
    %198 = vmatprep.subr.bf16.mxu0 0
    %199 = vmatpush1.bf16.msra.mxu0 0
    %200 = vmatprep.subr.bf16.mxu0 0
    %201 = vmatpush1.bf16.msra.mxu0 0
    %202 = vmatprep.mubr.bf16.mxu0 0
    %203 = vmatmul.mubr.bf16.gmra.mrb[0].mxu0 %v168
    %v204 = vpop.f32.mrb[0].mxu0
    %v205 = vadd.f32 %v152, %v204
    %v206 = vpop.f32.mrb[0].mxu0
    %v207 = vpop.f32.mrb[0].mxu0
    %v208 = vadd.f32 %v152, %v207
    %v209 = vpop.f32.mrb[0].mxu0
    %210 = vdwg.mxu0
    %v211 = vpack.c.bf16 %v208, %v205
    %v212 = vtanh.bf16.pop %v211
    %v214 = vlaneseq
    %v215 = vshrl.u32 %v214, 7
    %v216 = vsub.s32 0, %v215
    %v217 = vrot.slane %v81, %v216
    %v223 = vunpack.c.l.b16 %v75
    %v224 = vunpack.c.l.b16 %v76
    %v225 = vunpack.c.l.b16 %v77
    %v226 = vunpack.c.l.b16 %v78
    %v227 = vpack.c.b16 %v224, %v223
    %v228 = vpack.c.b16 %v226, %v225
    %v232 = vsel %vm166, %v212, 0
    %234 = vmatprep.subr.bf16.mxu0 0
    %235 = vmatpush1.bf16.msra.mxu0 %v227
    %236 = vmatprep.subr.bf16.mxu0 0
    %237 = vmatpush1.bf16.msra.mxu0 %v228
    %238 = vmatprep.subr.bf16.mxu0 0
    %239 = vmatpush1.bf16.msra.mxu0 0
    %240 = vmatprep.subr.bf16.mxu0 0
    %241 = vmatpush1.bf16.msra.mxu0 0
    %242 = vmatprep.subr.bf16.mxu0 0
    %243 = vmatpush1.bf16.msra.mxu0 0
    %244 = vmatprep.subr.bf16.mxu0 0
    %245 = vmatpush1.bf16.msra.mxu0 0
    %246 = vmatprep.subr.bf16.mxu0 0
    %247 = vmatpush1.bf16.msra.mxu0 0
    %248 = vmatprep.subr.bf16.mxu0 0
    %249 = vmatpush1.bf16.msra.mxu0 0
    %250 = vmatprep.subr.bf16.mxu0 0
    %251 = vmatpush1.bf16.msra.mxu0 0
    %252 = vmatprep.subr.bf16.mxu0 0
    %253 = vmatpush1.bf16.msra.mxu0 0
    %254 = vmatprep.subr.bf16.mxu0 0
    %255 = vmatpush1.bf16.msra.mxu0 0
    %256 = vmatprep.subr.bf16.mxu0 0
    %257 = vmatpush1.bf16.msra.mxu0 0
    %258 = vmatprep.subr.bf16.mxu0 0
    %259 = vmatpush1.bf16.msra.mxu0 0
    %260 = vmatprep.subr.bf16.mxu0 0
    %261 = vmatpush1.bf16.msra.mxu0 0
    %262 = vmatprep.subr.bf16.mxu0 0
    %263 = vmatpush1.bf16.msra.mxu0 0
    %264 = vmatprep.subr.bf16.mxu0 0
    %265 = vmatpush1.bf16.msra.mxu0 0
    %266 = vmatprep.mubr.bf16.mxu0 0
    %267 = vmatmul.mubr.bf16.gmra.mrb[0].mxu0 %v232
    %v268 = vpop.f32.mrb[0].mxu0
    %v269 = vadd.f32 %v217, %v268
    %v270 = vpop.f32.mrb[0].mxu0
    %v271 = vpop.f32.mrb[0].mxu0
    %v272 = vadd.f32 %v217, %v271
    %v273 = vpop.f32.mrb[0].mxu0
    %274 = vdwg.mxu0
    %v275 = vsub.f32 0.0, %v269
    %v276 = vsub.f32 0.0, %v272
    %v277 = vmul.f32 %v275, 1.442695
    %v278 = vpow.pop %v277
    %v279 = vmul.f32 %v276, 1.442695
    %v280 = vpow.pop %v279
    %v281 = vadd.f32 %v278, 1.0
    %v282 = vadd.f32 %v280, 1.0
    %v283 = vrcp.pop %v281
    %v284 = vrcp.pop %v282
    %285 = vst [vmem:[#allocation8] sm:$0xff] %v283
    %286 = vst [vmem:[#allocation8 + $0x8] sm:$0xff] %v284
    // Predicated region
    $region42: #{tpu_custom_call.1} parent=1 // pred_check
      _
    $region43: #{tpu_custom_call.1} parent=1 // pred_check_branch
      %288 = sbr.rel (0) target = $region45
    $region44: #{tpu_custom_call.1} parent=1 // pred_region
      %s290 = ssub.s32 256, 256
      %291 = vsyncadd [#allocation4], %s290
      %s292 = sshll.u32 [#allocation8], 4
      %s293 = int_to_ptr.vmem [resolvable:$true] %s292
      %298 = dma.vmem_to_hbm [thread:$0]  %s293, 256, %s7, [#allocation4], 128, 128, 8
    $region45: #{tpu_custom_call.1} parent=1 // pred_fallthru
      _
    // Predicated region
    $region46: #{tpu_custom_call.1} parent=1 // pred_check
      _
    $region47: #{tpu_custom_call.1} parent=1 // pred_check_branch
      %300 = sbr.rel (0) target = $region49
    $region48: #{tpu_custom_call.1} parent=1 // pred_region
      %301 = dma.done [#allocation4], 256
    $region49: #{tpu_custom_call.1} parent=1 // pred_fallthru
      _
    %302 = vsyncpa [#allocation3], 1
    %303 = vsyncpa [#allocation6], 1
    %304 = vsyncpa [#allocation4], 1

// kernel: tpu_custom_call.1
$region0: #{tpu_custom_call.1}
  #allocation0 [shape = 'u32[]', space=smem, size = 0x4, offset = 0x4, fixed_abs, tag = 'smem constant byte address 0x4 - core index']
  #allocation1 [shape = 'u32[144,128]{1,0:T(1,128)}', space=vmem, size = 0x12000, scoped, tag = 'internal scratch']
  %s0 = inlined_call_operand.hbm [shape: bf16[16,16], index: 0, kind: input, shape index: {}]
  %s1 = inlined_call_operand.hbm [shape: bf16[16,32], index: 1, kind: input, shape index: {}]
  %s2 = inlined_call_operand.vmem [shape: f32[1,32], index: 2, kind: input, shape index: {}]
  %s3 = inlined_call_operand.hbm [shape: bf16[32,32], index: 3, kind: input, shape index: {}]
  %s4 = inlined_call_operand.vmem [shape: f32[1,32], index: 4, kind: input, shape index: {}]
  %s5 = inlined_call_operand.vmem [shape: bf16[32,128], index: 5, kind: input, shape index: {}]
  %s6 = inlined_call_operand.vmem [shape: f32[1,128], index: 6, kind: input, shape index: {}]
  %s7 = inlined_call_operand.hbm [shape: f32[16,128], index: 7, kind: output, shape index: {}]
  %s8 = sld [smem:[#allocation0]]
  $region50: #{tpu_custom_call.1} parent=0
    _
  %s10 = ssub.s32 1, %s8
  %s11 = scalar_select 0, %s10, %s8
  $region1: #{tpu_custom_call.1} parent=0
    #allocation2 [shape = 'u8[4096]{0}', space=vmem, size = 0x1000, scoped, tag = 'input window, operand 0, single buffered']
    #allocation3 [shape = 's32[1]{0}', space=sflag, size = 0x4, scoped, tag = 'scoped memory for tpu_custom_call.1']
    #allocation4 [shape = 's32[1]{0}', space=sflag, size = 0x4, scoped, tag = 'scoped memory for tpu_custom_call.1']
    #allocation5 [shape = 'u8[4096]{0}', space=vmem, size = 0x1000, scoped, tag = 'input window, operand 1, single buffered']
    #allocation6 [shape = 's32[1]{0}', space=sflag, size = 0x4, scoped, tag = 'scoped memory for tpu_custom_call.1']
    #allocation7 [shape = 'u8[8192]{0}', space=vmem, size = 0x2000, scoped, tag = 'input window, operand 3, single buffered']
    #allocation8 [shape = 'u8[8192]{0}', space=vmem, size = 0x2000, scoped, tag = 'output window, operand 0, single buffered']
    %12 = vsyncpa [#allocation3], 0
    %13 = vsyncpa [#allocation6], 0
    %14 = vsyncpa [#allocation4], 0
    // Predicated region
    $region2: #{tpu_custom_call.1} parent=1 // pred_check
      _
    $region3: #{tpu_custom_call.1} parent=1 // pred_check_branch
      %16 = sbr.rel (0) target = $region5
    $region4: #{tpu_custom_call.1} parent=1 // pred_region
      %s18 = ssub.s32 128, 128
      %19 = vsyncadd [#allocation3], %s18
      %s20 = sshll.u32 [#allocation2], 4
      %s21 = int_to_ptr.vmem [resolvable:$true] %s20
      %26 = dma.hbm_to_vmem [thread:$0]  %s0, 128, %s21, [#allocation3], 64, 64, 4
    $region5: #{tpu_custom_call.1} parent=1 // pred_fallthru
      _
    // Predicated region
    $region6: #{tpu_custom_call.1} parent=1 // pred_check
      _
    $region7: #{tpu_custom_call.1} parent=1 // pred_check_branch
      %28 = sbr.rel (0) target = $region9
    $region8: #{tpu_custom_call.1} parent=1 // pred_region
      %s30 = ssub.s32 128, 128
      %31 = vsyncadd [#allocation6], %s30
      %s32 = sshll.u32 [#allocation5], 4
      %s33 = int_to_ptr.vmem [resolvable:$true] %s32
      %38 = dma.hbm_to_vmem [thread:$0]  %s1, 128, %s33, [#allocation6], 64, 64, 4
    $region9: #{tpu_custom_call.1} parent=1 // pred_fallthru
      _
    // Predicated region
    $region10: #{tpu_custom_call.1} parent=1 // pred_check
      _
    $region11: #{tpu_custom_call.1} parent=1 // pred_check_branch
      %40 = sbr.rel (0) target = $region13
    $region12: #{tpu_custom_call.1} parent=1 // pred_region
      _
    $region13: #{tpu_custom_call.1} parent=1 // pred_fallthru
      _
    // Predicated region
    $region14: #{tpu_custom_call.1} parent=1 // pred_check
      _
    $region15: #{tpu_custom_call.1} parent=1 // pred_check_branch
      %42 = sbr.rel (0) target = $region17
    $region16: #{tpu_custom_call.1} parent=1 // pred_region
      %s44 = ssub.s32 256, 256
      %45 = vsyncadd [#allocation6], %s44
      %s46 = sshll.u32 [#allocation7], 4
      %s47 = int_to_ptr.vmem [resolvable:$true] %s46
      %52 = dma.hbm_to_vmem [thread:$0]  %s3, 256, %s47, [#allocation6], 64, 64, 4
    $region17: #{tpu_custom_call.1} parent=1 // pred_fallthru
      _
    // Predicated region
    $region18: #{tpu_custom_call.1} parent=1 // pred_check
      _
    $region19: #{tpu_custom_call.1} parent=1 // pred_check_branch
      %54 = sbr.rel (0) target = $region21
    $region20: #{tpu_custom_call.1} parent=1 // pred_region
      _
    $region21: #{tpu_custom_call.1} parent=1 // pred_fallthru
      _
    // Predicated region
    $region22: #{tpu_custom_call.1} parent=1 // pred_check
      _
    $region23: #{tpu_custom_call.1} parent=1 // pred_check_branch
      %56 = sbr.rel (0) target = $region25
    $region24: #{tpu_custom_call.1} parent=1 // pred_region
      _
    $region25: #{tpu_custom_call.1} parent=1 // pred_fallthru
      _
    // Predicated region
    $region26: #{tpu_custom_call.1} parent=1 // pred_check
      _
    $region27: #{tpu_custom_call.1} parent=1 // pred_check_branch
      %58 = sbr.rel (0) target = $region29
    $region28: #{tpu_custom_call.1} parent=1 // pred_region
      _
    $region29: #{tpu_custom_call.1} parent=1 // pred_fallthru
      _
    // Predicated region
    $region30: #{tpu_custom_call.1} parent=1 // pred_check
      _
    $region31: #{tpu_custom_call.1} parent=1 // pred_check_branch
      %60 = sbr.rel (0) target = $region33
    $region32: #{tpu_custom_call.1} parent=1 // pred_region
      %61 = dma.done [#allocation3], 128
    $region33: #{tpu_custom_call.1} parent=1 // pred_fallthru
      _
    // Predicated region
    $region34: #{tpu_custom_call.1} parent=1 // pred_check
      _
    $region35: #{tpu_custom_call.1} parent=1 // pred_check_branch
      %63 = sbr.rel (0) target = $region37
    $region36: #{tpu_custom_call.1} parent=1 // pred_region
      %64 = dma.done [#allocation6], 128
    $region37: #{tpu_custom_call.1} parent=1 // pred_fallthru
      _
    // Predicated region
    $region38: #{tpu_custom_call.1} parent=1 // pred_check
      _
    $region39: #{tpu_custom_call.1} parent=1 // pred_check_branch
      %66 = sbr.rel (0) target = $region41
    $region40: #{tpu_custom_call.1} parent=1 // pred_region
      %67 = dma.done [#allocation6], 256
    $region41: #{tpu_custom_call.1} parent=1 // pred_fallthru
      _
    %v69 = vld [vmem:[#allocation5] sm:$0xf]
    %v70 = vld [vmem:[#allocation5 + $0x4] sm:$0xf]
    %v71 = vld [vmem:[#allocation7] sm:$0xf]
    %v72 = vld [vmem:[#allocation7 + $0x4] sm:$0xf]
    %v73 = vld [vmem:[#allocation7 + $0x8] sm:$0xf]
    %v74 = vld [vmem:[#allocation7 + $0xc] sm:$0xf]
    %v75 = vld [vmem:[%s5] sm:$0xf]
    %v76 = vld [vmem:[%s5 + $0x4] sm:$0xf]
    %v77 = vld [vmem:[%s5 + $0x8] sm:$0xf]
    %v78 = vld [vmem:[%s5 + $0xc] sm:$0xf]
    %v79 = vld [vmem:[%s2] sm:$0x1]
    %v80 = vld [vmem:[%s4] sm:$0x1]
    %v81 = vld [vmem:[%s6] sm:$0x1]
    %v82 = vld [vmem:[#allocation2] sm:$0xf]
    %v83 = vld [vmem:[#allocation2 + $0x4] sm:$0xf]
    %v85 = vlaneseq
    %v86 = vshrl.u32 %v85, 7
    %v87 = vsub.s32 0, %v86
    %v88 = vrot.slane %v79, %v87
    %v92 = vunpack.c.l.b16 %v82
    %v93 = vunpack.c.l.b16 %v83
    %v94 = vpack.c.b16 %v93, %v92
    %v97 = vunpack.c.l.b16 %v69
    %v98 = vunpack.c.l.b16 %v70
    %v99 = vpack.c.b16 %v98, %v97
    %vm101 = vcmask 130048
    %v103 = vsel %vm101, %v94, 0
    %105 = vmatprep.subr.bf16.mxu0 0
    %106 = vmatpush1.bf16.msra.mxu0 %v99
    %107 = vmatprep.subr.bf16.mxu0 0
    %108 = vmatpush1.bf16.msra.mxu0 0
    %109 = vmatprep.subr.bf16.mxu0 0
    %110 = vmatpush1.bf16.msra.mxu0 0
    %111 = vmatprep.subr.bf16.mxu0 0
    %112 = vmatpush1.bf16.msra.mxu0 0
    %113 = vmatprep.subr.bf16.mxu0 0
    %114 = vmatpush1.bf16.msra.mxu0 0
    %115 = vmatprep.subr.bf16.mxu0 0
    %116 = vmatpush1.bf16.msra.mxu0 0
    %117 = vmatprep.subr.bf16.mxu0 0
    %118 = vmatpush1.bf16.msra.mxu0 0
    %119 = vmatprep.subr.bf16.mxu0 0
    %120 = vmatpush1.bf16.msra.mxu0 0
    %121 = vmatprep.subr.bf16.mxu0 0
    %122 = vmatpush1.bf16.msra.mxu0 0
    %123 = vmatprep.subr.bf16.mxu0 0
    %124 = vmatpush1.bf16.msra.mxu0 0
    %125 = vmatprep.subr.bf16.mxu0 0
    %126 = vmatpush1.bf16.msra.mxu0 0
    %127 = vmatprep.subr.bf16.mxu0 0
    %128 = vmatpush1.bf16.msra.mxu0 0
    %129 = vmatprep.subr.bf16.mxu0 0
    %130 = vmatpush1.bf16.msra.mxu0 0
    %131 = vmatprep.subr.bf16.mxu0 0
    %132 = vmatpush1.bf16.msra.mxu0 0
    %133 = vmatprep.subr.bf16.mxu0 0
    %134 = vmatpush1.bf16.msra.mxu0 0
    %135 = vmatprep.subr.bf16.mxu0 0
    %136 = vmatpush1.bf16.msra.mxu0 0
    %137 = vmatprep.mubr.bf16.mxu0 0
    %138 = vmatmul.mubr.bf16.gmra.mrb[0].mxu0 %v103
    %v139 = vpop.f32.mrb[0].mxu0
    %v140 = vadd.f32 %v88, %v139
    %v141 = vpop.f32.mrb[0].mxu0
    %v142 = vpop.f32.mrb[0].mxu0
    %v143 = vadd.f32 %v88, %v142
    %v144 = vpop.f32.mrb[0].mxu0
    %145 = vdwg.mxu0
    %v146 = vpack.c.bf16 %v143, %v140
    %v147 = vtanh.bf16.pop %v146
    %v149 = vlaneseq
    %v150 = vshrl.u32 %v149, 7
    %v151 = vsub.s32 0, %v150
    %v152 = vrot.slane %v80, %v151
    %v158 = vunpack.c.l.b16 %v71
    %v159 = vunpack.c.l.b16 %v72
    %v160 = vunpack.c.l.b16 %v73
    %v161 = vunpack.c.l.b16 %v74
    %v162 = vpack.c.b16 %v159, %v158
    %v163 = vpack.c.b16 %v161, %v160
    %vm166 = vcmask 261120
    %v168 = vsel %vm166, %v147, 0
    %170 = vmatprep.subr.bf16.mxu0 0
    %171 = vmatpush1.bf16.msra.mxu0 %v162
    %172 = vmatprep.subr.bf16.mxu0 0
    %173 = vmatpush1.bf16.msra.mxu0 %v163
    %174 = vmatprep.subr.bf16.mxu0 0
    %175 = vmatpush1.bf16.msra.mxu0 0
    %176 = vmatprep.subr.bf16.mxu0 0
    %177 = vmatpush1.bf16.msra.mxu0 0
    %178 = vmatprep.subr.bf16.mxu0 0
    %179 = vmatpush1.bf16.msra.mxu0 0
    %180 = vmatprep.subr.bf16.mxu0 0
    %181 = vmatpush1.bf16.msra.mxu0 0
    %182 = vmatprep.subr.bf16.mxu0 0
    %183 = vmatpush1.bf16.msra.mxu0 0
    %184 = vmatprep.subr.bf16.mxu0 0
    %185 = vmatpush1.bf16.msra.mxu0 0
    %186 = vmatprep.subr.bf16.mxu0 0
    %187 = vmatpush1.bf16.msra.mxu0 0
    %188 = vmatprep.subr.bf16.mxu0 0
    %189 = vmatpush1.bf16.msra.mxu0 0
    %190 = vmatprep.subr.bf16.mxu0 0
    %191 = vmatpush1.bf16.msra.mxu0 0
    %192 = vmatprep.subr.bf16.mxu0 0
    %193 = vmatpush1.bf16.msra.mxu0 0
    %194 = vmatprep.subr.bf16.mxu0 0
    %195 = vmatpush1.bf16.msra.mxu0 0
    %196 = vmatprep.subr.bf16.mxu0 0
    %197 = vmatpush1.bf16.msra.mxu0 0
    %198 = vmatprep.subr.bf16.mxu0 0
    %199 = vmatpush1.bf16.msra.mxu0 0
    %200 = vmatprep.subr.bf16.mxu0 0
    %201 = vmatpush1.bf16.msra.mxu0 0
    %202 = vmatprep.mubr.bf16.mxu0 0
    %203 = vmatmul.mubr.bf16.gmra.mrb[0].mxu0 %v168
    %v204 = vpop.f32.mrb[0].mxu0
    %v205 = vadd.f32 %v152, %v204
    %v206 = vpop.f32.mrb[0].mxu0
    %v207 = vpop.f32.mrb[0].mxu0
    %v208 = vadd.f32 %v152, %v207
    %v209 = vpop.f32.mrb[0].mxu0
    %210 = vdwg.mxu0
    %v211 = vpack.c.bf16 %v208, %v205
    %v212 = vtanh.bf16.pop %v211
    %v214 = vlaneseq
    %v215 = vshrl.u32 %v214, 7
    %v216 = vsub.s32 0, %v215
    %v217 = vrot.slane %v81, %v216
    %v223 = vunpack.c.l.b16 %v75
    %v224 = vunpack.c.l.b16 %v76
    %v225 = vunpack.c.l.b16 %v77
    %v226 = vunpack.c.l.b16 %v78
    %v227 = vpack.c.b16 %v224, %v223
    %v228 = vpack.c.b16 %v226, %v225
    %v232 = vsel %vm166, %v212, 0
    %234 = vmatprep.subr.bf16.mxu0 0
    %235 = vmatpush1.bf16.msra.mxu0 %v227
    %236 = vmatprep.subr.bf16.mxu0 0
    %237 = vmatpush1.bf16.msra.mxu0 %v228
    %238 = vmatprep.subr.bf16.mxu0 0
    %239 = vmatpush1.bf16.msra.mxu0 0
    %240 = vmatprep.subr.bf16.mxu0 0
    %241 = vmatpush1.bf16.msra.mxu0 0
    %242 = vmatprep.subr.bf16.mxu0 0
    %243 = vmatpush1.bf16.msra.mxu0 0
    %244 = vmatprep.subr.bf16.mxu0 0
    %245 = vmatpush1.bf16.msra.mxu0 0
    %246 = vmatprep.subr.bf16.mxu0 0
    %247 = vmatpush1.bf16.msra.mxu0 0
    %248 = vmatprep.subr.bf16.mxu0 0
    %249 = vmatpush1.bf16.msra.mxu0 0
    %250 = vmatprep.subr.bf16.mxu0 0
    %251 = vmatpush1.bf16.msra.mxu0 0
    %252 = vmatprep.subr.bf16.mxu0 0
    %253 = vmatpush1.bf16.msra.mxu0 0
    %254 = vmatprep.subr.bf16.mxu0 0
    %255 = vmatpush1.bf16.msra.mxu0 0
    %256 = vmatprep.subr.bf16.mxu0 0
    %257 = vmatpush1.bf16.msra.mxu0 0
    %258 = vmatprep.subr.bf16.mxu0 0
    %259 = vmatpush1.bf16.msra.mxu0 0
    %260 = vmatprep.subr.bf16.mxu0 0
    %261 = vmatpush1.bf16.msra.mxu0 0
    %262 = vmatprep.subr.bf16.mxu0 0
    %263 = vmatpush1.bf16.msra.mxu0 0
    %264 = vmatprep.subr.bf16.mxu0 0
    %265 = vmatpush1.bf16.msra.mxu0 0
    %266 = vmatprep.mubr.bf16.mxu0 0
    %267 = vmatmul.mubr.bf16.gmra.mrb[0].mxu0 %v232
    %v268 = vpop.f32.mrb[0].mxu0
    %v269 = vadd.f32 %v217, %v268
    %v270 = vpop.f32.mrb[0].mxu0
    %v271 = vpop.f32.mrb[0].mxu0
    %v272 = vadd.f32 %v217, %v271
    %v273 = vpop.f32.mrb[0].mxu0
    %274 = vdwg.mxu0
    %v275 = vsub.f32 0.0, %v269
    %v276 = vsub.f32 0.0, %v272
    %v277 = vmul.f32 %v275, 1.442695
    %v278 = vpow.pop %v277
    %v279 = vmul.f32 %v276, 1.442695
    %v280 = vpow.pop %v279
    %v281 = vadd.f32 %v278, 1.0
    %v282 = vadd.f32 %v280, 1.0
    %v283 = vrcp.pop %v281
    %v284 = vrcp.pop %v282
    %285 = vst [vmem:[#allocation8] sm:$0xff] %v283
    %286 = vst [vmem:[#allocation8 + $0x8] sm:$0xff] %v284
    // Predicated region
    $region42: #{tpu_custom_call.1} parent=1 // pred_check
      _
    $region43: #{tpu_custom_call.1} parent=1 // pred_check_branch
      %288 = sbr.rel (0) target = $region45
    $region44: #{tpu_custom_call.1} parent=1 // pred_region
      %s290 = ssub.s32 256, 256
      %291 = vsyncadd [#allocation4], %s290
      %s292 = sshll.u32 [#allocation8], 4
      %s293 = int_to_ptr.vmem [resolvable:$true] %s292
      %298 = dma.vmem_to_hbm [thread:$0]  %s293, 256, %s7, [#allocation4], 128, 128, 8
    $region45: #{tpu_custom_call.1} parent=1 // pred_fallthru
      _
    // Predicated region
    $region46: #{tpu_custom_call.1} parent=1 // pred_check
      _
    $region47: #{tpu_custom_call.1} parent=1 // pred_check_branch
      %300 = sbr.rel (0) target = $region49
    $region48: #{tpu_custom_call.1} parent=1 // pred_region
      %301 = dma.done [#allocation4], 256
    $region49: #{tpu_custom_call.1} parent=1 // pred_fallthru
      _
    %302 = vsyncpa [#allocation3], 1
    %303 = vsyncpa [#allocation6], 1
    %304 = vsyncpa [#allocation4], 1

</llo_original>
